<compile_context>
chip_gen: v6e
topology: v6e:2x2x1
jax: 0.10.0
libtpu: 0.0.40
codegen_flags: <defaults>
</compile_context>

<pallas_src>
import math
import functools

import jax
import jax.numpy as jnp
from jax.experimental import pallas as pl
from jax.experimental.pallas import tpu as pltpu

HEAD_PAD = 128   # lane-dense head width: [pi logits | v | zero padding]
BT_CAP = 1024    # max rows per grid step (<2 MB/step double-buffered — fits all gens)


def _round_up(x, m):
    return ((x + m - 1) // m) * m


def actor_critic_kernel(x_ref, w1_ref, w2_ref, wh_ref, b_ref, out_ref,
                        *, fc1_dims, fc2_dims):
    # fc1 -> ReLU -> fc2 -> ReLU -> fused (pi | v) head; everything VMEM-resident.
    x = x_ref[...]                                   # (BT, IN)   bf16
    b1 = b_ref[0:1, :fc1_dims]                       # (1, FC1)   f32
    b2 = b_ref[1:2, :fc2_dims]                       # (1, FC2)   f32
    bh = b_ref[2:3, :HEAD_PAD]                       # (1, 128)   f32

    h1 = jnp.dot(x, w1_ref[...], preferred_element_type=jnp.float32) + b1
    h1 = jnp.maximum(h1, 0.0).astype(jnp.bfloat16)
    h2 = jnp.dot(h1, w2_ref[...], preferred_element_type=jnp.float32) + b2
    h2 = jnp.maximum(h2, 0.0).astype(jnp.bfloat16)
    # Fused pi/v head: one MXU pass, one unmasked lane-dense store (bf16 slab).
    head = jnp.dot(h2, wh_ref[...], preferred_element_type=jnp.float32) + bh
    out_ref[...] = head.astype(out_ref.dtype)


def prepare_params(params, n_actions):
    """One-time packing: fuse pi|v head, pack biases, cast weights to bf16.

    Hoisted out of the forward path so the per-call hot path is just the
    Pallas kernel (plus a cheap pad/slice).
    """
    w1, b1, w2, b2, wpi, bpi, wv, bv = params
    in_dim = int(w1.shape[0])
    fc1_dims = int(w1.shape[1])
    fc2_dims = int(w2.shape[1])
    assert n_actions + 1 <= HEAD_PAD

    # Pack pi|v heads into one lane-dense weight (fc2, 128). Zero columns guarantee
    # the padded output lanes are exactly 0.
    wh = jnp.zeros((fc2_dims, HEAD_PAD), jnp.float32)
    wh = wh.at[:, :n_actions].set(wpi).at[:, n_actions:n_actions + 1].set(wv)

    # Pack the three biases into one buffer (fewer DMA descriptors).
    bw = max(fc1_dims, fc2_dims, HEAD_PAD)
    b_packed = jnp.zeros((3, bw), jnp.float32)
    b_packed = b_packed.at[0, :fc1_dims].set(b1.reshape(-1))
    b_packed = b_packed.at[1, :fc2_dims].set(b2.reshape(-1))
    b_packed = b_packed.at[2, :n_actions].set(bpi.reshape(-1))
    b_packed = b_packed.at[2, n_actions].set(bv.reshape(-1)[0])

    return dict(
        w1=jnp.asarray(w1, jnp.bfloat16),
        w2=jnp.asarray(w2, jnp.bfloat16),
        wh=wh.astype(jnp.bfloat16),
        b=b_packed,
        in_dim=in_dim,
        fc1_dims=fc1_dims,
        fc2_dims=fc2_dims,
        n_actions=n_actions,
    )


def _batch_tile(B):
    """Rows per grid step. Multiple of 16 (bf16 sublane packing)."""
    B16 = _round_up(B, 16)
    if B16 <= 128:
        return B16                     # tiny batch: one tile, no split overhead
    # >= 2 grid steps so the "parallel" batch axis shards across both v7x TCs;
    # capped at BT_CAP to amortize per-step overhead without blowing up padding.
    half = _round_up((B16 + 1) // 2, 16)
    return min(BT_CAP, half)


def actor_critic_forward(state, packed):
    """state: (B, in_features) f32. Returns (pi (B, n_actions) f32, v (B, 1) f32)."""
    B, in_dim = state.shape
    assert in_dim == packed["in_dim"]
    fc1_dims = packed["fc1_dims"]
    fc2_dims = packed["fc2_dims"]
    n_actions = packed["n_actions"]
    bw = packed["b"].shape[1]

    x = state.astype(jnp.bfloat16)
    BT = _batch_tile(B)
    B_pad = _round_up(B, BT)
    if B_pad != B:
        x = jnp.pad(x, ((0, B_pad - B), (0, 0)))
    grid = (B_pad // BT,)

    flops = 2 * B_pad * (in_dim * fc1_dims + fc1_dims * fc2_dims + fc2_dims * HEAD_PAD)
    bytes_accessed = (x.size * 2 + packed["w1"].size * 2 + packed["w2"].size * 2
                      + packed["wh"].size * 2 + packed["b"].size * 4
                      + B_pad * HEAD_PAD * 2)          # bf16 output slab

    kernel = functools.partial(actor_critic_kernel,
                               fc1_dims=fc1_dims, fc2_dims=fc2_dims)

    # NOTE: per-step footprint at BT_CAP=1024 is < 2 MB double-buffered, well under
    # the default scoped VMEM on every generation; only set vmem_limit_bytes here if
    # BT_CAP is ever pushed past ~2048 (re-budget against v7x's 64 MiB physical).
    out = pl.pallas_call(
        kernel,
        out_shape=jax.ShapeDtypeStruct((B_pad, HEAD_PAD), jnp.bfloat16),
        grid=grid,
        in_specs=[
            pl.BlockSpec((BT, in_dim), lambda i: (i, 0)),          # x: marches over batch
            pl.BlockSpec((in_dim, fc1_dims), lambda i: (0, 0)),    # weights: VMEM-resident
            pl.BlockSpec((fc1_dims, fc2_dims), lambda i: (0, 0)),
            pl.BlockSpec((fc2_dims, HEAD_PAD), lambda i: (0, 0)),
            pl.BlockSpec((3, bw), lambda i: (0, 0)),               # packed biases
        ],
        out_specs=pl.BlockSpec((BT, HEAD_PAD), lambda i: (i, 0)),
        compiler_params=pltpu.CompilerParams(dimension_semantics=("parallel",)),
        cost_estimate=pl.CostEstimate(flops=flops, transcendentals=0,
                                      bytes_accessed=bytes_accessed),
    )(x, packed["w1"], packed["w2"], packed["wh"], packed["b"])

    pi = out[:B, :n_actions].astype(jnp.float32)
    v = out[:B, n_actions:n_actions + 1].astype(jnp.float32)
    return pi, v


def init_params(key, input_dim, n_actions, fc1_dims=256, fc2_dims=256):
    """Deterministic init mimicking nn.Linear's U(-1/sqrt(fan_in), 1/sqrt(fan_in))."""
    def linear(k, fan_in, fan_out):
        kw, kb = jax.random.split(k)
        bound = 1.0 / math.sqrt(fan_in)
        # stored as (in, out) so the kernel computes x @ W
        w = jax.random.uniform(kw, (fan_in, fan_out), jnp.float32, -bound, bound)
        b = jax.random.uniform(kb, (1, fan_out), jnp.float32, -bound, bound)
        return w, b

    k1, k2, k3, k4 = jax.random.split(key, 4)
    w1, b1 = linear(k1, input_dim, fc1_dims)
    w2, b2 = linear(k2, fc1_dims, fc2_dims)
    wpi, bpi = linear(k3, fc2_dims, n_actions)
    wv, bv = linear(k4, fc2_dims, 1)
    return (w1, b1, w2, b2, wpi, bpi, wv, bv)


if __name__ == "__main__":
    key = jax.random.PRNGKey(0)
    k_params, k_state = jax.random.split(key)

    batch = 8
    input_dim = 8       # module's input_dim=[8]
    n_actions = 4
    fc1_dims = 256
    fc2_dims = 256

    params = init_params(k_params, input_dim, n_actions, fc1_dims, fc2_dims)
    packed = prepare_params(params, n_actions)          # one-time, off the hot path
    state = jax.random.normal(k_state, (batch, input_dim), dtype=jnp.float32)

    pi, v = actor_critic_forward(state, packed)
    jax.block_until_ready((pi, v))
    assert pi.shape == (batch, n_actions) and v.shape == (batch, 1)

    (w1, b1, w2, b2, wpi, bpi, wv, bv) = params

    # Reference 1: mimic the kernel's bf16 quantization (weights/acts + bf16 output).
    f32 = lambda a: a.astype(jnp.bfloat16).astype(jnp.float32)
    bf16r = lambda a: a.astype(jnp.bfloat16).astype(jnp.float32)
    h1q = jnp.maximum(f32(state) @ f32(w1) + b1, 0.0)
    h2q = jnp.maximum(f32(h1q) @ f32(w2) + b2, 0.0)
    pi_q = bf16r(f32(h2q) @ f32(wpi) + bpi)
    v_q = bf16r(f32(h2q) @ f32(wv) + bv)
    assert jnp.allclose(pi, pi_q, atol=1e-2, rtol=1e-2)
    assert jnp.allclose(v, v_q, atol=1e-2, rtol=1e-2)

    # Reference 2: full-precision f32 reference (loose tolerance for bf16 weights/output).
    h1 = jnp.maximum(state @ w1 + b1, 0.0)
    h2 = jnp.maximum(h1 @ w2 + b2, 0.0)
    pi_ref = h2 @ wpi + bpi
    v_ref = h2 @ wv + bv
    assert jnp.allclose(pi, pi_ref, atol=5e-2, rtol=5e-2)
    assert jnp.allclose(v, v_ref, atol=5e-2, rtol=5e-2)

    # Exercise the multi-tile / 2-grid-step path (v7x megacore sharding) as well.
    big_state = jax.random.normal(k_state, (300, input_dim), dtype=jnp.float32)
    pi_b, v_b = actor_critic_forward(big_state, packed)
    jax.block_until_ready((pi_b, v_b))
    assert pi_b.shape == (300, n_actions) and v_b.shape == (300, 1)
    h1b = jnp.maximum(big_state @ w1 + b1, 0.0)
    h2b = jnp.maximum(h1b @ w2 + b2, 0.0)
    assert jnp.allclose(pi_b, h2b @ wpi + bpi, atol=5e-2, rtol=5e-2)
    assert jnp.allclose(v_b, h2b @ wv + bv, atol=5e-2, rtol=5e-2)

    print("KERNEL_OK")
</pallas_src>

<mosaic_0001>
module attributes {stable_mosaic.version = 11 : i64} {
  func.func @actor_critic_kernel(%arg0: i32, %arg1: memref<16x8xbf16, #tpu.memory_space<vmem>>, %arg2: memref<8x256xbf16, #tpu.memory_space<vmem>>, %arg3: memref<256x256xbf16, #tpu.memory_space<vmem>>, %arg4: memref<256x128xbf16, #tpu.memory_space<vmem>>, %arg5: memref<3x256xf32, #tpu.memory_space<vmem>>, %arg6: memref<16x128xbf16, #tpu.memory_space<vmem>>) attributes {dimension_semantics = [#tpu.dimension_semantics<parallel>], iteration_bounds = array<i64: 1>, scalar_prefetch = 0 : i64, scratch_operands = 0 : i64, tpu.core_type = #tpu.core_type<tc>, window_params = [{transform_indices = @transform_0, window_bounds = array<i64: 16, 8>}, {pipeline_mode = #tpu.pipeline_mode<synchronous>, transform_indices = @transform_1, window_bounds = array<i64: 8, 256>}, {pipeline_mode = #tpu.pipeline_mode<synchronous>, transform_indices = @transform_2, window_bounds = array<i64: 256, 256>}, {pipeline_mode = #tpu.pipeline_mode<synchronous>, transform_indices = @transform_3, window_bounds = array<i64: 256, 128>}, {pipeline_mode = #tpu.pipeline_mode<synchronous>, transform_indices = @transform_4, window_bounds = array<i64: 3, 256>}, {transform_indices = @transform_5, window_bounds = array<i64: 16, 128>}]} {
    %c0 = arith.constant 0 : index
    %c0_0 = arith.constant 0 : index
    %0 = vector.load %arg1[%c0, %c0_0] : memref<16x8xbf16, #tpu.memory_space<vmem>>, vector<16x8xbf16>
    %c0_1 = arith.constant 0 : index
    %c0_2 = arith.constant 0 : index
    %1 = vector.load %arg5[%c0_1, %c0_2] : memref<3x256xf32, #tpu.memory_space<vmem>>, vector<1x256xf32>
    %c1 = arith.constant 1 : index
    %c0_3 = arith.constant 0 : index
    %2 = vector.load %arg5[%c1, %c0_3] : memref<3x256xf32, #tpu.memory_space<vmem>>, vector<1x256xf32>
    %c2 = arith.constant 2 : index
    %c0_4 = arith.constant 0 : index
    %3 = vector.load %arg5[%c2, %c0_4] : memref<3x256xf32, #tpu.memory_space<vmem>>, vector<1x128xf32>
    %c0_5 = arith.constant 0 : index
    %c0_6 = arith.constant 0 : index
    %4 = vector.load %arg2[%c0_5, %c0_6] : memref<8x256xbf16, #tpu.memory_space<vmem>>, vector<8x256xbf16>
    %cst = arith.constant dense<0.000000e+00> : vector<16x256xf32>
    %5 = tpu.matmul %0, %4, %cst {dimension_numbers = #tpu.dot_dimension_numbers<[1], [0], [0], [1], [0, 0, 1, 1], [], []>} : vector<16x8xbf16>, vector<8x256xbf16>, vector<16x256xf32> -> vector<16x256xf32>
    %6 = vector.broadcast %1 : vector<1x256xf32> to vector<16x256xf32>
    %7 = arith.addf %5, %6 : vector<16x256xf32>
    %cst_7 = arith.constant 0.000000e+00 : f32
    %8 = vector.broadcast %cst_7 : f32 to vector<16x256xf32>
    %9 = arith.maximumf %7, %8 : vector<16x256xf32>
    %10 = arith.truncf %9 : vector<16x256xf32> to vector<16x256xbf16>
    %c0_8 = arith.constant 0 : index
    %c0_9 = arith.constant 0 : index
    %11 = vector.load %arg3[%c0_8, %c0_9] : memref<256x256xbf16, #tpu.memory_space<vmem>>, vector<256x256xbf16>
    %cst_10 = arith.constant dense<0.000000e+00> : vector<16x256xf32>
    %12 = tpu.matmul %10, %11, %cst_10 {dimension_numbers = #tpu.dot_dimension_numbers<[1], [0], [0], [1], [0, 0, 1, 1], [], []>} : vector<16x256xbf16>, vector<256x256xbf16>, vector<16x256xf32> -> vector<16x256xf32>
    %13 = vector.broadcast %2 : vector<1x256xf32> to vector<16x256xf32>
    %14 = arith.addf %12, %13 : vector<16x256xf32>
    %cst_11 = arith.constant 0.000000e+00 : f32
    %15 = vector.broadcast %cst_11 : f32 to vector<16x256xf32>
    %16 = arith.maximumf %14, %15 : vector<16x256xf32>
    %17 = arith.truncf %16 : vector<16x256xf32> to vector<16x256xbf16>
    %c0_12 = arith.constant 0 : index
    %c0_13 = arith.constant 0 : index
    %18 = vector.load %arg4[%c0_12, %c0_13] : memref<256x128xbf16, #tpu.memory_space<vmem>>, vector<256x128xbf16>
    %cst_14 = arith.constant dense<0.000000e+00> : vector<16x128xf32>
    %19 = tpu.matmul %17, %18, %cst_14 {dimension_numbers = #tpu.dot_dimension_numbers<[1], [0], [0], [1], [0, 0, 1, 1], [], []>} : vector<16x256xbf16>, vector<256x128xbf16>, vector<16x128xf32> -> vector<16x128xf32>
    %20 = vector.broadcast %3 : vector<1x128xf32> to vector<16x128xf32>
    %21 = arith.addf %19, %20 : vector<16x128xf32>
    %22 = arith.truncf %21 : vector<16x128xf32> to vector<16x128xbf16>
    %c0_15 = arith.constant 0 : index
    %c0_16 = arith.constant 0 : index
    %23 = vector.load %arg6[%c0_15, %c0_16] : memref<16x128xbf16, #tpu.memory_space<vmem>>, vector<16x128xbf16>
    tpu.vector_store %arg6[%c0_15, %c0_16], %22 {strides = array<i32>} : memref<16x128xbf16, #tpu.memory_space<vmem>>, vector<16x128xbf16>,
    return
  }
  func.func @transform_0(%arg0: i32) -> (i32, i32) {
    %c0_i32 = arith.constant 0 : i32
    %c0_i32_0 = arith.constant 0 : i32
    return %arg0, %c0_i32 : i32, i32
  }
  func.func @transform_1(%arg0: i32) -> (i32, i32) {
    %c0_i32 = arith.constant 0 : i32
    %c0_i32_0 = arith.constant 0 : i32
    %c0_i32_1 = arith.constant 0 : i32
    return %c0_i32, %c0_i32_0 : i32, i32
  }
  func.func @transform_2(%arg0: i32) -> (i32, i32) {
    %c0_i32 = arith.constant 0 : i32
    %c0_i32_0 = arith.constant 0 : i32
    %c0_i32_1 = arith.constant 0 : i32
    return %c0_i32, %c0_i32_0 : i32, i32
  }
  func.func @transform_3(%arg0: i32) -> (i32, i32) {
    %c0_i32 = arith.constant 0 : i32
    %c0_i32_0 = arith.constant 0 : i32
    %c0_i32_1 = arith.constant 0 : i32
    return %c0_i32, %c0_i32_0 : i32, i32
  }
  func.func @transform_4(%arg0: i32) -> (i32, i32) {
    %c0_i32 = arith.constant 0 : i32
    %c0_i32_0 = arith.constant 0 : i32
    %c0_i32_1 = arith.constant 0 : i32
    return %c0_i32, %c0_i32_0 : i32, i32
  }
  func.func @transform_5(%arg0: i32) -> (i32, i32) {
    %c0_i32 = arith.constant 0 : i32
    %c0_i32_0 = arith.constant 0 : i32
    return %arg0, %c0_i32 : i32, i32
  }
}

</mosaic_0001>

<llo_original>
// kernel: tpu_custom_call.1
$region0: #{tpu_custom_call.1}
  #allocation0 [shape = 'u32[]', space=smem, size = 0x4, offset = 0x4, fixed_abs, tag = 'smem constant byte address 0x4 - core index']
  #allocation1 [shape = 'u32[144,128]{1,0:T(1,128)}', space=vmem, size = 0x12000, scoped, tag = 'internal scratch']
  %s0 = inlined_call_operand.vmem [shape: bf16[16,8], index: 0, kind: input, shape index: {}]
  %s1 = inlined_call_operand.vmem [shape: bf16[8,256], index: 1, kind: input, shape index: {}]
  %s2 = inlined_call_operand.hbm [shape: bf16[256,256], index: 2, kind: input, shape index: {}]
  %s3 = inlined_call_operand.hbm [shape: bf16[256,128], index: 3, kind: input, shape index: {}]
  %s4 = inlined_call_operand.vmem [shape: f32[3,256], index: 4, kind: input, shape index: {}]
  %s5 = inlined_call_operand.hbm [shape: bf16[16,128], index: 5, kind: output, shape index: {}]
  %s6 = sld [smem:[#allocation0]]
  $region38: #{tpu_custom_call.1} parent=0
    _
  %s8 = ssub.s32 1, %s6
  %s9 = scalar_select 0, %s8, %s6
  $region1: #{tpu_custom_call.1} parent=0
    #allocation2 [shape = 'u8[131072]{0}', space=vmem, size = 0x20000, scoped, tag = 'input window, operand 2, single buffered']
    #allocation3 [shape = 's32[1]{0}', space=sflag, size = 0x4, scoped, tag = 'scoped memory for tpu_custom_call.1']
    #allocation4 [shape = 's32[1]{0}', space=sflag, size = 0x4, scoped, tag = 'scoped memory for tpu_custom_call.1']
    #allocation5 [shape = 'u8[65536]{0}', space=vmem, size = 0x10000, scoped, tag = 'input window, operand 3, single buffered']
    #allocation6 [shape = 's32[1]{0}', space=sflag, size = 0x4, scoped, tag = 'scoped memory for tpu_custom_call.1']
    #allocation7 [shape = 'u8[4096]{0}', space=vmem, size = 0x1000, scoped, tag = 'output window, operand 0, single buffered']
    %10 = vsyncpa [#allocation3], 0
    %11 = vsyncpa [#allocation6], 0
    %12 = vsyncpa [#allocation4], 0
    // Predicated region
    $region2: #{tpu_custom_call.1} parent=1 // pred_check
      _
    $region3: #{tpu_custom_call.1} parent=1 // pred_check_branch
      %14 = sbr.rel (0) target = $region5
    $region4: #{tpu_custom_call.1} parent=1 // pred_region
      _
    $region5: #{tpu_custom_call.1} parent=1 // pred_fallthru
      _
    // Predicated region
    $region6: #{tpu_custom_call.1} parent=1 // pred_check
      _
    $region7: #{tpu_custom_call.1} parent=1 // pred_check_branch
      %16 = sbr.rel (0) target = $region9
    $region8: #{tpu_custom_call.1} parent=1 // pred_region
      _
    $region9: #{tpu_custom_call.1} parent=1 // pred_fallthru
      _
    // Predicated region
    $region10: #{tpu_custom_call.1} parent=1 // pred_check
      _
    $region11: #{tpu_custom_call.1} parent=1 // pred_check_branch
      %18 = sbr.rel (0) target = $region13
    $region12: #{tpu_custom_call.1} parent=1 // pred_region
      %s20 = ssub.s32 4096, 4096
      %21 = vsyncadd [#allocation3], %s20
      %s22 = sshll.u32 [#allocation2], 4
      %s23 = int_to_ptr.vmem [resolvable:$true] %s22
      %28 = dma.hbm_to_vmem [thread:$0]  %s2, 4096, %s23, [#allocation3], 128, 128, 8
    $region13: #{tpu_custom_call.1} parent=1 // pred_fallthru
      _
    // Predicated region
    $region14: #{tpu_custom_call.1} parent=1 // pred_check
      _
    $region15: #{tpu_custom_call.1} parent=1 // pred_check_branch
      %30 = sbr.rel (0) target = $region17
    $region16: #{tpu_custom_call.1} parent=1 // pred_region
      %s32 = ssub.s32 2048, 2048
      %33 = vsyncadd [#allocation6], %s32
      %s34 = sshll.u32 [#allocation5], 4
      %s35 = int_to_ptr.vmem [resolvable:$true] %s34
      %40 = dma.hbm_to_vmem [thread:$0]  %s3, 2048, %s35, [#allocation6], 64, 64, 4
    $region17: #{tpu_custom_call.1} parent=1 // pred_fallthru
      _
    // Predicated region
    $region18: #{tpu_custom_call.1} parent=1 // pred_check
      _
    $region19: #{tpu_custom_call.1} parent=1 // pred_check_branch
      %42 = sbr.rel (0) target = $region21
    $region20: #{tpu_custom_call.1} parent=1 // pred_region
      _
    $region21: #{tpu_custom_call.1} parent=1 // pred_fallthru
      _
    // Predicated region
    $region22: #{tpu_custom_call.1} parent=1 // pred_check
      _
    $region23: #{tpu_custom_call.1} parent=1 // pred_check_branch
      %44 = sbr.rel (0) target = $region25
    $region24: #{tpu_custom_call.1} parent=1 // pred_region
      %45 = dma.done [#allocation3], 4096
    $region25: #{tpu_custom_call.1} parent=1 // pred_fallthru
      _
    // Predicated region
    $region26: #{tpu_custom_call.1} parent=1 // pred_check
      _
    $region27: #{tpu_custom_call.1} parent=1 // pred_check_branch
      %47 = sbr.rel (0) target = $region29
    $region28: #{tpu_custom_call.1} parent=1 // pred_region
      %48 = dma.done [#allocation6], 2048
    $region29: #{tpu_custom_call.1} parent=1 // pred_fallthru
      _
    %v50 = vld [vmem:[%s0] sm:$0xf]
    %v51 = vld [vmem:[%s0 + $0x4] sm:$0xf]
    %v52 = vld [vmem:[%s4] ss:$4 sm:$0x3]
    %s53 = scalar_lea.vmem %s4, 1
    %v54 = vld [vmem:[%s53] ss:$4 sm:$0x3]
    %v55 = vld [vmem:[%s4 + $0x2] sm:$0x1]
    %v56 = vld [vmem:[%s1] sm:$0xff]
    %v58 = vlaneseq
    %v59 = vshrl.u32 %v58, 7
    %v60 = vsub.s32 0, %v59
    %v61 = vrot.slane %v52, %v60
    %v62 = vlaneseq
    %v63 = vshrl.u32 %v62, 7
    %v64 = vsub.s32 1, %v63
    %v65 = vrot.slane %v52, %v64
    %v70 = vunpack.c.l.b16 %v50
    %v71 = vunpack.c.l.b16 %v51
    %v72 = vpack.c.b16 %v71, %v70
    %v74 = vunpack.c.l.b16 %v56
    %v75 = vunpack.c.h.b16 %v56
    %v76 = vpack.c.b16 %v74, %v74
    %v77 = vpack.c.b16 %v75, %v75
    %vm78 = vcmask 64512
    %v80 = vsel %vm78, %v72, 0
    %vm82 = vcmask 1043456
    %v84 = vsel %vm82, %v76, 0
    %v87 = vsel %vm82, %v77, 0
    %89 = vmatprep.subr.bf16.mxu0 0
    %90 = vmatpush1.bf16.msra.mxu0 0
    %91 = vmatprep.subr.bf16.mxu0 0
    %92 = vmatpush1.bf16.msra.mxu0 0
    %93 = vmatprep.subr.bf16.mxu0 0
    %94 = vmatpush1.bf16.msra.mxu0 0
    %95 = vmatprep.subr.bf16.mxu0 0
    %96 = vmatpush1.bf16.msra.mxu0 0
    %97 = vmatprep.subr.bf16.mxu0 0
    %98 = vmatpush1.bf16.msra.mxu0 0
    %99 = vmatprep.subr.bf16.mxu0 0
    %100 = vmatpush1.bf16.msra.mxu0 0
    %101 = vmatprep.subr.bf16.mxu0 0
    %102 = vmatpush1.bf16.msra.mxu0 0
    %103 = vmatprep.subr.bf16.mxu0 %v87
    %104 = vmatpush1.bf16.msra.mxu0 %v84
    %105 = vmatprep.subr.bf16.mxu0 0
    %106 = vmatpush2.bf16.msra.mxu0 0
    %107 = vmatprep.subr.bf16.mxu0 0
    %108 = vmatpush2.bf16.msra.mxu0 0
    %109 = vmatprep.subr.bf16.mxu0 0
    %110 = vmatpush2.bf16.msra.mxu0 0
    %111 = vmatprep.subr.bf16.mxu0 0
    %112 = vmatpush2.bf16.msra.mxu0 0
    %113 = vmatprep.subr.bf16.mxu0 0
    %114 = vmatpush2.bf16.msra.mxu0 0
    %115 = vmatprep.subr.bf16.mxu0 0
    %116 = vmatpush2.bf16.msra.mxu0 0
    %117 = vmatprep.subr.bf16.mxu0 0
    %118 = vmatpush2.bf16.msra.mxu0 0
    %119 = vmatprep.subr.bf16.mxu0 0
    %120 = vmatpush2.bf16.msra.mxu0 0
    %121 = vmatprep.mubr.bf16.mxu0 0
    %122 = vmatmul.mubr.bf16.gmra.mxu0 %v80
    %v123 = vpop.f32.mrf.mxu0
    %v124 = vadd.f32 %v61, %v123
    %v125 = vpop.f32.mrf.mxu0
    %v126 = vadd.f32 %v65, %v125
    %v127 = vpop.f32.mrf.mxu0
    %v128 = vadd.f32 %v61, %v127
    %v129 = vpop.f32.mrf.mxu0
    %v130 = vadd.f32 %v65, %v129
    %131 = vdwg.mxu0
    %v132 = vmax.f32 %v124, 0.0
    %v133 = vmax.f32 %v126, 0.0
    %v134 = vmax.f32 %v128, 0.0
    %v135 = vmax.f32 %v130, 0.0
    %v136 = vpack.c.bf16 %v134, %v132
    %v137 = vpack.c.bf16 %v135, %v133
    %v138 = vld [vmem:[#allocation2] sm:$0xff]
    %v139 = vld [vmem:[#allocation2 + $0x8] sm:$0xff]
    %v140 = vld [vmem:[#allocation2 + $0x10] sm:$0xff]
    %v141 = vld [vmem:[#allocation2 + $0x18] sm:$0xff]
    %v142 = vld [vmem:[#allocation2 + $0x20] sm:$0xff]
    %v143 = vld [vmem:[#allocation2 + $0x28] sm:$0xff]
    %v144 = vld [vmem:[#allocation2 + $0x30] sm:$0xff]
    %v145 = vld [vmem:[#allocation2 + $0x38] sm:$0xff]
    %v146 = vld [vmem:[#allocation2 + $0x40] sm:$0xff]
    %v147 = vld [vmem:[#allocation2 + $0x48] sm:$0xff]
    %v148 = vld [vmem:[#allocation2 + $0x50] sm:$0xff]
    %v149 = vld [vmem:[#allocation2 + $0x58] sm:$0xff]
    %v150 = vld [vmem:[#allocation2 + $0x60] sm:$0xff]
    %v151 = vld [vmem:[#allocation2 + $0x68] sm:$0xff]
    %v152 = vld [vmem:[#allocation2 + $0x70] sm:$0xff]
    %v153 = vld [vmem:[#allocation2 + $0x78] sm:$0xff]
    %v154 = vld [vmem:[#allocation2 + $0x80] sm:$0xff]
    %v155 = vld [vmem:[#allocation2 + $0x88] sm:$0xff]
    %v156 = vld [vmem:[#allocation2 + $0x90] sm:$0xff]
    %v157 = vld [vmem:[#allocation2 + $0x98] sm:$0xff]
    %v158 = vld [vmem:[#allocation2 + $0xa0] sm:$0xff]
    %v159 = vld [vmem:[#allocation2 + $0xa8] sm:$0xff]
    %v160 = vld [vmem:[#allocation2 + $0xb0] sm:$0xff]
    %v161 = vld [vmem:[#allocation2 + $0xb8] sm:$0xff]
    %v162 = vld [vmem:[#allocation2 + $0xc0] sm:$0xff]
    %v163 = vld [vmem:[#allocation2 + $0xc8] sm:$0xff]
    %v164 = vld [vmem:[#allocation2 + $0xd0] sm:$0xff]
    %v165 = vld [vmem:[#allocation2 + $0xd8] sm:$0xff]
    %v166 = vld [vmem:[#allocation2 + $0xe0] sm:$0xff]
    %v167 = vld [vmem:[#allocation2 + $0xe8] sm:$0xff]
    %v168 = vld [vmem:[#allocation2 + $0xf0] sm:$0xff]
    %v169 = vld [vmem:[#allocation2 + $0xf8] sm:$0xff]
    %v171 = vlaneseq
    %v172 = vshrl.u32 %v171, 7
    %v173 = vsub.s32 0, %v172
    %v174 = vrot.slane %v54, %v173
    %v175 = vlaneseq
    %v176 = vshrl.u32 %v175, 7
    %v177 = vsub.s32 1, %v176
    %v178 = vrot.slane %v54, %v177
    %v213 = vunpack.c.l.b16 %v138
    %v214 = vunpack.c.h.b16 %v138
    %v215 = vunpack.c.l.b16 %v139
    %v216 = vunpack.c.h.b16 %v139
    %v217 = vunpack.c.l.b16 %v140
    %v218 = vunpack.c.h.b16 %v140
    %v219 = vunpack.c.l.b16 %v141
    %v220 = vunpack.c.h.b16 %v141
    %v221 = vunpack.c.l.b16 %v142
    %v222 = vunpack.c.h.b16 %v142
    %v223 = vunpack.c.l.b16 %v143
    %v224 = vunpack.c.h.b16 %v143
    %v225 = vunpack.c.l.b16 %v144
    %v226 = vunpack.c.h.b16 %v144
    %v227 = vunpack.c.l.b16 %v145
    %v228 = vunpack.c.h.b16 %v145
    %v229 = vunpack.c.l.b16 %v146
    %v230 = vunpack.c.h.b16 %v146
    %v231 = vunpack.c.l.b16 %v147
    %v232 = vunpack.c.h.b16 %v147
    %v233 = vunpack.c.l.b16 %v148
    %v234 = vunpack.c.h.b16 %v148
    %v235 = vunpack.c.l.b16 %v149
    %v236 = vunpack.c.h.b16 %v149
    %v237 = vunpack.c.l.b16 %v150
    %v238 = vunpack.c.h.b16 %v150
    %v239 = vunpack.c.l.b16 %v151
    %v240 = vunpack.c.h.b16 %v151
    %v241 = vunpack.c.l.b16 %v152
    %v242 = vunpack.c.h.b16 %v152
    %v243 = vunpack.c.l.b16 %v153
    %v244 = vunpack.c.h.b16 %v153
    %v245 = vunpack.c.l.b16 %v154
    %v246 = vunpack.c.h.b16 %v154
    %v247 = vunpack.c.l.b16 %v155
    %v248 = vunpack.c.h.b16 %v155
    %v249 = vunpack.c.l.b16 %v156
    %v250 = vunpack.c.h.b16 %v156
    %v251 = vunpack.c.l.b16 %v157
    %v252 = vunpack.c.h.b16 %v157
    %v253 = vunpack.c.l.b16 %v158
    %v254 = vunpack.c.h.b16 %v158
    %v255 = vunpack.c.l.b16 %v159
    %v256 = vunpack.c.h.b16 %v159
    %v257 = vunpack.c.l.b16 %v160
    %v258 = vunpack.c.h.b16 %v160
    %v259 = vunpack.c.l.b16 %v161
    %v260 = vunpack.c.h.b16 %v161
    %v261 = vunpack.c.l.b16 %v162
    %v262 = vunpack.c.h.b16 %v162
    %v263 = vunpack.c.l.b16 %v163
    %v264 = vunpack.c.h.b16 %v163
    %v265 = vunpack.c.l.b16 %v164
    %v266 = vunpack.c.h.b16 %v164
    %v267 = vunpack.c.l.b16 %v165
    %v268 = vunpack.c.h.b16 %v165
    %v269 = vunpack.c.l.b16 %v166
    %v270 = vunpack.c.h.b16 %v166
    %v271 = vunpack.c.l.b16 %v167
    %v272 = vunpack.c.h.b16 %v167
    %v273 = vunpack.c.l.b16 %v168
    %v274 = vunpack.c.h.b16 %v168
    %v275 = vunpack.c.l.b16 %v169
    %v276 = vunpack.c.h.b16 %v169
    %v277 = vpack.c.b16 %v215, %v213
    %v278 = vpack.c.b16 %v216, %v214
    %v279 = vpack.c.b16 %v219, %v217
    %v280 = vpack.c.b16 %v220, %v218
    %v281 = vpack.c.b16 %v223, %v221
    %v282 = vpack.c.b16 %v224, %v222
    %v283 = vpack.c.b16 %v227, %v225
    %v284 = vpack.c.b16 %v228, %v226
    %v285 = vpack.c.b16 %v231, %v229
    %v286 = vpack.c.b16 %v232, %v230
    %v287 = vpack.c.b16 %v235, %v233
    %v288 = vpack.c.b16 %v236, %v234
    %v289 = vpack.c.b16 %v239, %v237
    %v290 = vpack.c.b16 %v240, %v238
    %v291 = vpack.c.b16 %v243, %v241
    %v292 = vpack.c.b16 %v244, %v242
    %v293 = vpack.c.b16 %v247, %v245
    %v294 = vpack.c.b16 %v248, %v246
    %v295 = vpack.c.b16 %v251, %v249
    %v296 = vpack.c.b16 %v252, %v250
    %v297 = vpack.c.b16 %v255, %v253
    %v298 = vpack.c.b16 %v256, %v254
    %v299 = vpack.c.b16 %v259, %v257
    %v300 = vpack.c.b16 %v260, %v258
    %v301 = vpack.c.b16 %v263, %v261
    %v302 = vpack.c.b16 %v264, %v262
    %v303 = vpack.c.b16 %v267, %v265
    %v304 = vpack.c.b16 %v268, %v266
    %v305 = vpack.c.b16 %v271, %v269
    %v306 = vpack.c.b16 %v272, %v270
    %v307 = vpack.c.b16 %v275, %v273
    %v308 = vpack.c.b16 %v276, %v274
    %341 = vmatprep.subr.bf16.mxu0 %v292
    %342 = vmatpush1.bf16.msra.mxu0 %v291
    %343 = vmatprep.subr.bf16.mxu0 %v290
    %344 = vmatpush1.bf16.msra.mxu0 %v289
    %345 = vmatprep.subr.bf16.mxu0 %v288
    %346 = vmatpush1.bf16.msra.mxu0 %v287
    %347 = vmatprep.subr.bf16.mxu0 %v286
    %348 = vmatpush1.bf16.msra.mxu0 %v285
    %349 = vmatprep.subr.bf16.mxu0 %v284
    %350 = vmatpush1.bf16.msra.mxu0 %v283
    %351 = vmatprep.subr.bf16.mxu0 %v282
    %352 = vmatpush1.bf16.msra.mxu0 %v281
    %353 = vmatprep.subr.bf16.mxu0 %v280
    %354 = vmatpush1.bf16.msra.mxu0 %v279
    %355 = vmatprep.subr.bf16.mxu0 %v278
    %356 = vmatpush1.bf16.msra.mxu0 %v277
    %357 = vmatprep.subr.bf16.mxu0 %v308
    %358 = vmatpush2.bf16.msra.mxu0 %v307
    %359 = vmatprep.subr.bf16.mxu0 %v306
    %360 = vmatpush2.bf16.msra.mxu0 %v305
    %361 = vmatprep.subr.bf16.mxu0 %v304
    %362 = vmatpush2.bf16.msra.mxu0 %v303
    %363 = vmatprep.subr.bf16.mxu0 %v302
    %364 = vmatpush2.bf16.msra.mxu0 %v301
    %365 = vmatprep.subr.bf16.mxu0 %v300
    %366 = vmatpush2.bf16.msra.mxu0 %v299
    %367 = vmatprep.subr.bf16.mxu0 %v298
    %368 = vmatpush2.bf16.msra.mxu0 %v297
    %369 = vmatprep.subr.bf16.mxu0 %v296
    %370 = vmatpush2.bf16.msra.mxu0 %v295
    %371 = vmatprep.subr.bf16.mxu0 %v294
    %372 = vmatpush2.bf16.msra.mxu0 %v293
    %373 = vmatprep.mubr.bf16.mxu0 %v137
    %374 = vmatmul.mubr.bf16.gmra.mxu0 %v136
    %v375 = vpop.f32.mrf.mxu0
    %v376 = vadd.f32 %v174, %v375
    %v377 = vpop.f32.mrf.mxu0
    %v378 = vadd.f32 %v178, %v377
    %v379 = vpop.f32.mrf.mxu0
    %v380 = vadd.f32 %v174, %v379
    %v381 = vpop.f32.mrf.mxu0
    %v382 = vadd.f32 %v178, %v381
    %383 = vdwg.mxu0
    %v384 = vmax.f32 %v376, 0.0
    %v385 = vmax.f32 %v378, 0.0
    %v386 = vmax.f32 %v380, 0.0
    %v387 = vmax.f32 %v382, 0.0
    %v388 = vpack.c.bf16 %v386, %v384
    %v389 = vpack.c.bf16 %v387, %v385
    %v390 = vld [vmem:[#allocation5] sm:$0xf]
    %v391 = vld [vmem:[#allocation5 + $0x4] sm:$0xf]
    %v392 = vld [vmem:[#allocation5 + $0x8] sm:$0xf]
    %v393 = vld [vmem:[#allocation5 + $0xc] sm:$0xf]
    %v394 = vld [vmem:[#allocation5 + $0x10] sm:$0xf]
    %v395 = vld [vmem:[#allocation5 + $0x14] sm:$0xf]
    %v396 = vld [vmem:[#allocation5 + $0x18] sm:$0xf]
    %v397 = vld [vmem:[#allocation5 + $0x1c] sm:$0xf]
    %v398 = vld [vmem:[#allocation5 + $0x20] sm:$0xf]
    %v399 = vld [vmem:[#allocation5 + $0x24] sm:$0xf]
    %v400 = vld [vmem:[#allocation5 + $0x28] sm:$0xf]
    %v401 = vld [vmem:[#allocation5 + $0x2c] sm:$0xf]
    %v402 = vld [vmem:[#allocation5 + $0x30] sm:$0xf]
    %v403 = vld [vmem:[#allocation5 + $0x34] sm:$0xf]
    %v404 = vld [vmem:[#allocation5 + $0x38] sm:$0xf]
    %v405 = vld [vmem:[#allocation5 + $0x3c] sm:$0xf]
    %v406 = vld [vmem:[#allocation5 + $0x40] sm:$0xf]
    %v407 = vld [vmem:[#allocation5 + $0x44] sm:$0xf]
    %v408 = vld [vmem:[#allocation5 + $0x48] sm:$0xf]
    %v409 = vld [vmem:[#allocation5 + $0x4c] sm:$0xf]
    %v410 = vld [vmem:[#allocation5 + $0x50] sm:$0xf]
    %v411 = vld [vmem:[#allocation5 + $0x54] sm:$0xf]
    %v412 = vld [vmem:[#allocation5 + $0x58] sm:$0xf]
    %v413 = vld [vmem:[#allocation5 + $0x5c] sm:$0xf]
    %v414 = vld [vmem:[#allocation5 + $0x60] sm:$0xf]
    %v415 = vld [vmem:[#allocation5 + $0x64] sm:$0xf]
    %v416 = vld [vmem:[#allocation5 + $0x68] sm:$0xf]
    %v417 = vld [vmem:[#allocation5 + $0x6c] sm:$0xf]
    %v418 = vld [vmem:[#allocation5 + $0x70] sm:$0xf]
    %v419 = vld [vmem:[#allocation5 + $0x74] sm:$0xf]
    %v420 = vld [vmem:[#allocation5 + $0x78] sm:$0xf]
    %v421 = vld [vmem:[#allocation5 + $0x7c] sm:$0xf]
    %v422 = vlaneseq
    %v423 = vshrl.u32 %v422, 7
    %v424 = vsub.s32 0, %v423
    %v425 = vrot.slane %v55, %v424
    %v458 = vunpack.c.l.b16 %v390
    %v459 = vunpack.c.l.b16 %v391
    %v460 = vunpack.c.l.b16 %v392
    %v461 = vunpack.c.l.b16 %v393
    %v462 = vunpack.c.l.b16 %v394
    %v463 = vunpack.c.l.b16 %v395
    %v464 = vunpack.c.l.b16 %v396
    %v465 = vunpack.c.l.b16 %v397
    %v466 = vunpack.c.l.b16 %v398
    %v467 = vunpack.c.l.b16 %v399
    %v468 = vunpack.c.l.b16 %v400
    %v469 = vunpack.c.l.b16 %v401
    %v470 = vunpack.c.l.b16 %v402
    %v471 = vunpack.c.l.b16 %v403
    %v472 = vunpack.c.l.b16 %v404
    %v473 = vunpack.c.l.b16 %v405
    %v474 = vunpack.c.l.b16 %v406
    %v475 = vunpack.c.l.b16 %v407
    %v476 = vunpack.c.l.b16 %v408
    %v477 = vunpack.c.l.b16 %v409
    %v478 = vunpack.c.l.b16 %v410
    %v479 = vunpack.c.l.b16 %v411
    %v480 = vunpack.c.l.b16 %v412
    %v481 = vunpack.c.l.b16 %v413
    %v482 = vunpack.c.l.b16 %v414
    %v483 = vunpack.c.l.b16 %v415
    %v484 = vunpack.c.l.b16 %v416
    %v485 = vunpack.c.l.b16 %v417
    %v486 = vunpack.c.l.b16 %v418
    %v487 = vunpack.c.l.b16 %v419
    %v488 = vunpack.c.l.b16 %v420
    %v489 = vunpack.c.l.b16 %v421
    %v490 = vpack.c.b16 %v459, %v458
    %v491 = vpack.c.b16 %v461, %v460
    %v492 = vpack.c.b16 %v463, %v462
    %v493 = vpack.c.b16 %v465, %v464
    %v494 = vpack.c.b16 %v467, %v466
    %v495 = vpack.c.b16 %v469, %v468
    %v496 = vpack.c.b16 %v471, %v470
    %v497 = vpack.c.b16 %v473, %v472
    %v498 = vpack.c.b16 %v475, %v474
    %v499 = vpack.c.b16 %v477, %v476
    %v500 = vpack.c.b16 %v479, %v478
    %v501 = vpack.c.b16 %v481, %v480
    %v502 = vpack.c.b16 %v483, %v482
    %v503 = vpack.c.b16 %v485, %v484
    %v504 = vpack.c.b16 %v487, %v486
    %v505 = vpack.c.b16 %v489, %v488
    %522 = vmatprep.subr.bf16.mxu0 0
    %523 = vmatpush1.bf16.msra.mxu0 %v497
    %524 = vmatprep.subr.bf16.mxu0 0
    %525 = vmatpush1.bf16.msra.mxu0 %v496
    %526 = vmatprep.subr.bf16.mxu0 0
    %527 = vmatpush1.bf16.msra.mxu0 %v495
    %528 = vmatprep.subr.bf16.mxu0 0
    %529 = vmatpush1.bf16.msra.mxu0 %v494
    %530 = vmatprep.subr.bf16.mxu0 0
    %531 = vmatpush1.bf16.msra.mxu0 %v493
    %532 = vmatprep.subr.bf16.mxu0 0
    %533 = vmatpush1.bf16.msra.mxu0 %v492
    %534 = vmatprep.subr.bf16.mxu0 0
    %535 = vmatpush1.bf16.msra.mxu0 %v491
    %536 = vmatprep.subr.bf16.mxu0 0
    %537 = vmatpush1.bf16.msra.mxu0 %v490
    %538 = vmatprep.subr.bf16.mxu0 0
    %539 = vmatpush2.bf16.msra.mxu0 %v505
    %540 = vmatprep.subr.bf16.mxu0 0
    %541 = vmatpush2.bf16.msra.mxu0 %v504
    %542 = vmatprep.subr.bf16.mxu0 0
    %543 = vmatpush2.bf16.msra.mxu0 %v503
    %544 = vmatprep.subr.bf16.mxu0 0
    %545 = vmatpush2.bf16.msra.mxu0 %v502
    %546 = vmatprep.subr.bf16.mxu0 0
    %547 = vmatpush2.bf16.msra.mxu0 %v501
    %548 = vmatprep.subr.bf16.mxu0 0
    %549 = vmatpush2.bf16.msra.mxu0 %v500
    %550 = vmatprep.subr.bf16.mxu0 0
    %551 = vmatpush2.bf16.msra.mxu0 %v499
    %552 = vmatprep.subr.bf16.mxu0 0
    %553 = vmatpush2.bf16.msra.mxu0 %v498
    %554 = vmatprep.mubr.bf16.mxu0 %v389
    %555 = vmatmul.mubr.bf16.gmra.mxu0 %v388
    %v556 = vpop.f32.mrf.mxu0
    %v557 = vadd.f32 %v425, %v556
    %v558 = vpop.f32.mrf.mxu0
    %v559 = vpop.f32.mrf.mxu0
    %v560 = vadd.f32 %v425, %v559
    %v561 = vpop.f32.mrf.mxu0
    %562 = vdwg.mxu0
    %v563 = vpack.c.bf16 %v560, %v557
    %v565 = vunpack.c.l.b16 %v563
    %v566 = vunpack.c.h.b16 %v563
    %v567 = vpack.c.b16 %v565, %v565
    %v568 = vpack.c.b16 %v566, %v566
    %571 = vst [vmem:[#allocation7] sm:$0xf] %v567
    %572 = vst [vmem:[#allocation7 + $0x4] sm:$0xf] %v568
    // Predicated region
    $region30: #{tpu_custom_call.1} parent=1 // pred_check
      _
    $region31: #{tpu_custom_call.1} parent=1 // pred_check_branch
      %574 = sbr.rel (0) target = $region33
    $region32: #{tpu_custom_call.1} parent=1 // pred_region
      %s576 = ssub.s32 128, 128
      %577 = vsyncadd [#allocation4], %s576
      %s578 = sshll.u32 [#allocation7], 4
      %s579 = int_to_ptr.vmem [resolvable:$true] %s578
      %584 = dma.vmem_to_hbm [thread:$0]  %s579, 128, %s5, [#allocation4], 64, 64, 4
    $region33: #{tpu_custom_call.1} parent=1 // pred_fallthru
      _
    // Predicated region
    $region34: #{tpu_custom_call.1} parent=1 // pred_check
      _
    $region35: #{tpu_custom_call.1} parent=1 // pred_check_branch
      %586 = sbr.rel (0) target = $region37
    $region36: #{tpu_custom_call.1} parent=1 // pred_region
      %587 = dma.done [#allocation4], 128
    $region37: #{tpu_custom_call.1} parent=1 // pred_fallthru
      _
    %588 = vsyncpa [#allocation3], 1
    %589 = vsyncpa [#allocation6], 1
    %590 = vsyncpa [#allocation4], 1

</llo_original>
